<compile_context>
chip_gen: v6e
topology: v6e:2x2x1
jax: 0.10.0
libtpu: 0.0.40
codegen_flags: <defaults>
</compile_context>

<pallas_src>
import jax
import jax.numpy as jnp
from jax.experimental import pallas as pl
from jax.experimental.pallas import tpu as pltpu


def _linear_kernel(x_ref, w_ref, b_ref, o_ref):
    # Linear(1,1) is a scalar multiply-add on the VPU over a lane-dense tile.
    w = w_ref[0]          # f32 scalar from SMEM
    b = b_ref[0]          # f32 scalar from SMEM
    o_ref[...] = (x_ref[...] * w + b).astype(o_ref.dtype)


def liner_regression_forward(x, weight, bias, *, lane=512, max_block_rows=512):
    """x: (..., 1) (or (N,)) float array, weight: (1, 1), bias: (1,).

    Returns an array with the same shape/dtype as x (out_features == in_features == 1).
    """
    orig_shape = x.shape
    if not jnp.issubdtype(x.dtype, jnp.floating):
        x = x.astype(jnp.float32)
    out_dtype = x.dtype

    n = x.size
    x_flat = x.reshape(-1)

    # Lane-dense slab: pad the flat vector into (padded_rows, lane) with lane % 128 == 0.
    rows = pl.cdiv(n, lane)
    block_rows = min(max_block_rows, rows)
    padded_rows = pl.cdiv(rows, block_rows) * block_rows
    total = padded_rows * lane
    if total != n:
        x_flat = jnp.pad(x_flat, (0, total - n))
    x2d = x_flat.reshape(padded_rows, lane)

    # Parameters as 32-bit scalars in SMEM.
    w_smem = weight.reshape(1).astype(jnp.float32)
    b_smem = bias.reshape(1).astype(jnp.float32)

    grid = (padded_rows // block_rows,)

    out2d = pl.pallas_call(
        _linear_kernel,
        out_shape=jax.ShapeDtypeStruct((padded_rows, lane), out_dtype),
        grid_spec=pltpu.PrefetchScalarGridSpec(
            num_scalar_prefetch=0,
            grid=grid,
            in_specs=[
                # Lane-dense x tile: (block_rows, 512) -> up to 1 MiB f32 per step.
                pl.BlockSpec((block_rows, lane), lambda i: (i, 0)),
                # weight / bias: whole (1,) arrays resident in SMEM, read as scalars.
                pl.BlockSpec(memory_space=pltpu.MemorySpace.SMEM),
                pl.BlockSpec(memory_space=pltpu.MemorySpace.SMEM),
            ],
            out_specs=pl.BlockSpec((block_rows, lane), lambda i: (i, 0)),
        ),
        compiler_params=pltpu.CompilerParams(
            dimension_semantics=("parallel",),
        ),
    )(x2d, w_smem, b_smem)

    out_flat = out2d.reshape(-1)[:n]
    return out_flat.reshape(orig_shape)


if __name__ == "__main__":
    key = jax.random.PRNGKey(0)
    k_x, k_w, k_b, k_x2 = jax.random.split(key, 4)

    # Deterministic synthetic parameters for Linear(1, 1): weight (1,1), bias (1,)
    weight = jax.random.uniform(k_w, (1, 1), jnp.float32, minval=-1.0, maxval=1.0)
    bias = jax.random.uniform(k_b, (1,), jnp.float32, minval=-1.0, maxval=1.0)

    # Small input consistent with the module: a batch of scalars, shape (N, 1)
    N = 8
    x = jax.random.normal(k_x, (N, 1), jnp.float32)

    out = liner_regression_forward(x, weight, bias)
    out = jax.block_until_ready(out)

    ref = x @ weight.T + bias
    assert out.shape == (N, 1)
    assert jnp.allclose(out, ref, atol=1e-6), "mismatch vs reference (N=8)"

    # Ragged batch exercising the padding / lane-dense path.
    N2 = 777
    x2 = jax.random.normal(k_x2, (N2, 1), jnp.float32)
    out2 = jax.block_until_ready(liner_regression_forward(x2, weight, bias))
    ref2 = x2 @ weight.T + bias
    assert out2.shape == (N2, 1)
    assert jnp.allclose(out2, ref2, atol=1e-6), "mismatch vs reference (N=777)"

    print("KERNEL_OK")
</pallas_src>

<mosaic_0001>
module attributes {stable_mosaic.version = 11 : i64} {
  func.func @_linear_kernel(%arg0: i32, %arg1: memref<1x512xf32, #tpu.memory_space<vmem>>, %arg2: memref<1xf32, #tpu.memory_space<smem>>, %arg3: memref<1xf32, #tpu.memory_space<smem>>, %arg4: memref<1x512xf32, #tpu.memory_space<vmem>>) attributes {dimension_semantics = [#tpu.dimension_semantics<parallel>], iteration_bounds = array<i64: 1>, scalar_prefetch = 0 : i64, scratch_operands = 0 : i64, tpu.core_type = #tpu.core_type<tc>, window_params = [{transform_indices = @transform_0, window_bounds = array<i64: 1, 512>}, {transform_indices = @transform_1, window_bounds = array<i64: 1>}, {transform_indices = @transform_2, window_bounds = array<i64: 1>}, {transform_indices = @transform_3, window_bounds = array<i64: 1, 512>}]} {
    %c0 = arith.constant 0 : index
    %0 = memref.load %arg2[%c0] : memref<1xf32, #tpu.memory_space<smem>>
    %c0_0 = arith.constant 0 : index
    %1 = memref.load %arg3[%c0_0] : memref<1xf32, #tpu.memory_space<smem>>
    %c0_1 = arith.constant 0 : index
    %c0_2 = arith.constant 0 : index
    %2 = vector.load %arg1[%c0_1, %c0_2] : memref<1x512xf32, #tpu.memory_space<vmem>>, vector<1x512xf32>
    %3 = vector.broadcast %0 : f32 to vector<1x512xf32>
    %4 = arith.mulf %2, %3 : vector<1x512xf32>
    %5 = vector.broadcast %1 : f32 to vector<1x512xf32>
    %6 = arith.addf %4, %5 : vector<1x512xf32>
    %c0_3 = arith.constant 0 : index
    %c0_4 = arith.constant 0 : index
    %7 = vector.load %arg4[%c0_3, %c0_4] : memref<1x512xf32, #tpu.memory_space<vmem>>, vector<1x512xf32>
    tpu.vector_store %arg4[%c0_3, %c0_4], %6 {strides = array<i32>} : memref<1x512xf32, #tpu.memory_space<vmem>>, vector<1x512xf32>,
    return
  }
  func.func @transform_0(%arg0: i32) -> (i32, i32) {
    %c0_i32 = arith.constant 0 : i32
    %c0_i32_0 = arith.constant 0 : i32
    return %arg0, %c0_i32 : i32, i32
  }
  func.func @transform_1(%arg0: i32) -> i32 {
    %c0_i32 = arith.constant 0 : i32
    %c0_i32_0 = arith.constant 0 : i32
    return %c0_i32 : i32
  }
  func.func @transform_2(%arg0: i32) -> i32 {
    %c0_i32 = arith.constant 0 : i32
    %c0_i32_0 = arith.constant 0 : i32
    return %c0_i32 : i32
  }
  func.func @transform_3(%arg0: i32) -> (i32, i32) {
    %c0_i32 = arith.constant 0 : i32
    %c0_i32_0 = arith.constant 0 : i32
    return %arg0, %c0_i32 : i32, i32
  }
}

</mosaic_0001>

<llo_original>
// kernel: tpu_custom_call.1
$region0: #{tpu_custom_call.1}
  #allocation0 [shape = 'u32[]', space=smem, size = 0x4, offset = 0x4, fixed_abs, tag = 'smem constant byte address 0x4 - core index']
  #allocation1 [shape = 'u32[144,128]{1,0:T(1,128)}', space=vmem, size = 0x12000, scoped, tag = 'internal scratch']
  #allocation2 [shape = 'f32[1]{0:T(128)S(6)}', space=smem, size = 0x200, scoped, tag = 'scoped memory for tpu_custom_call.1']
  #allocation3 [shape = 'f32[1]{0:T(128)S(6)}', space=smem, size = 0x200, scoped, tag = 'scoped memory for tpu_custom_call.1']
  %s0 = inlined_call_operand.vmem [shape: f32[1,512], index: 0, kind: input, shape index: {}]
  %s1 = inlined_call_operand.<no memory space> [shape: f32[1], index: 1, kind: input, shape index: {}]
  %s2 = inlined_call_operand.<no memory space> [shape: f32[1], index: 2, kind: input, shape index: {}]
  %s3 = inlined_call_operand.hbm [shape: f32[1,512], index: 3, kind: output, shape index: {}]
  %s4 = sld [smem:[#allocation0]]
  $region22: #{tpu_custom_call.1} parent=0
    _
  %s6 = ssub.s32 1, %s4
  %s7 = scalar_select 0, %s6, %s4
  %8 = sst [smem:[#allocation2]] %s1
  %9 = sst [smem:[#allocation3]] %s2
  $region1: #{tpu_custom_call.1} parent=0
    #allocation4 [shape = 'u8[2048]{0}', space=vmem, size = 0x800, scoped, tag = 'output window, operand 0, single buffered']
    #allocation5 [shape = 's32[1]{0}', space=sflag, size = 0x4, scoped, tag = 'scoped memory for tpu_custom_call.1']
    %10 = vsyncpa [#allocation5], 0
    // Predicated region
    $region2: #{tpu_custom_call.1} parent=1 // pred_check
      _
    $region3: #{tpu_custom_call.1} parent=1 // pred_check_branch
      %12 = sbr.rel (0) target = $region5
    $region4: #{tpu_custom_call.1} parent=1 // pred_region
      _
    $region5: #{tpu_custom_call.1} parent=1 // pred_fallthru
      _
    // Predicated region
    $region6: #{tpu_custom_call.1} parent=1 // pred_check
      _
    $region7: #{tpu_custom_call.1} parent=1 // pred_check_branch
      %14 = sbr.rel (0) target = $region9
    $region8: #{tpu_custom_call.1} parent=1 // pred_region
      _
    $region9: #{tpu_custom_call.1} parent=1 // pred_fallthru
      _
    // Predicated region
    $region10: #{tpu_custom_call.1} parent=1 // pred_check
      _
    $region11: #{tpu_custom_call.1} parent=1 // pred_check_branch
      %16 = sbr.rel (0) target = $region13
    $region12: #{tpu_custom_call.1} parent=1 // pred_region
      _
    $region13: #{tpu_custom_call.1} parent=1 // pred_fallthru
      _
    %s17 = sld [smem:[#allocation2]]
    %s18 = sld [smem:[#allocation3]]
    %v19 = vld [vmem:[%s0] sm:$0xf]
    %v20 = vstv %s17
    %v21 = vmul.f32 %v19, %v20
    %v22 = vstv %s18
    %v23 = vadd.f32 %v21, %v22
    %v24 = vlaneseq
    %vm25 = vcmp.ge.s32.totalorder %v24, 0
    %vm26 = vcmp.lt.s32.totalorder %v24, 512
    %vm27 = vmand %vm25, %vm26
    %28 = vst.msk [vmem:[#allocation4] sm:$0xf] %vm27, %v23
    // Predicated region
    $region14: #{tpu_custom_call.1} parent=1 // pred_check
      _
    $region15: #{tpu_custom_call.1} parent=1 // pred_check_branch
      %30 = sbr.rel (0) target = $region17
    $region16: #{tpu_custom_call.1} parent=1 // pred_region
      %s32 = ssub.s32 64, 64
      %33 = vsyncadd [#allocation5], %s32
      %s35 = sshll.u32 [#allocation4], 4
      %s36 = int_to_ptr.vmem [resolvable:$true] %s35
      %38 = dma.vmem_to_hbm [thread:$0]  %s36, 64, %s3, [#allocation5]
    $region17: #{tpu_custom_call.1} parent=1 // pred_fallthru
      _
    // Predicated region
    $region18: #{tpu_custom_call.1} parent=1 // pred_check
      _
    $region19: #{tpu_custom_call.1} parent=1 // pred_check_branch
      %40 = sbr.rel (0) target = $region21
    $region20: #{tpu_custom_call.1} parent=1 // pred_region
      %41 = dma.done [#allocation5], 64
    $region21: #{tpu_custom_call.1} parent=1 // pred_fallthru
      _
    %42 = vsyncpa [#allocation5], 1

</llo_original>
